<compile_context>
chip_gen: v5e
topology: v5e:2x2
jax: 0.10.0
libtpu: 0.0.40
codegen_flags: <defaults>
</compile_context>

<pallas_src>
import jax
import jax.numpy as jnp
from jax.experimental import pallas as pl
from jax.experimental.pallas import tpu as pltpu  # noqa: F401  (TPU backend)

_LANE = 128     # lane (last-dim) tile
_SUBLANE = 8    # sublane (second-to-last-dim) tile


def _round_up(n, m):
    return ((n + m - 1) // m) * m


def _make_fcnn_kernel(n_layers, batch_real, out_real):
    """Kernel body: refs = (x, w0, b0, ..., w{n-1}, b{n-1}, out, argmax_idx)."""

    def kernel(*refs):
        x_ref = refs[0]
        out_ref = refs[1 + 2 * n_layers]
        idx_ref = refs[2 + 2 * n_layers]

        h = x_ref[...]
        for i in range(n_layers):                 # statically unrolled chain
            w = refs[1 + 2 * i][...]
            b = refs[2 + 2 * i][...]
            h = jnp.dot(h, w, preferred_element_type=jnp.float32)
            h = jnp.maximum(h + b, 0.0)           # Linear -> ReLU, every layer
        out_ref[...] = h.astype(out_ref.dtype)

        # Fused global argmax over the real (batch_real, out_real) region,
        # row-major flattened, first-max tie-break == torch.argmax(out).
        bp, op = out_ref.shape
        row = jax.lax.broadcasted_iota(jnp.int32, (bp, op), 0)
        col = jax.lax.broadcasted_iota(jnp.int32, (bp, op), 1)
        valid = (row < batch_real) & (col < out_real)
        vals = jnp.where(valid, h, jnp.float32(-1.0))        # post-ReLU h >= 0
        m = jnp.max(jnp.max(vals, axis=1, keepdims=True),    # (1, 1)
                    axis=0, keepdims=True)
        flat = row * jnp.int32(out_real) + col
        sentinel = jnp.int32(batch_real * out_real)
        cand = jnp.where(valid & (vals == m), flat, sentinel)
        idx_ref[...] = jnp.min(jnp.min(cand, axis=1, keepdims=True),
                               axis=0, keepdims=True)

    return kernel


def _build_fused_call(padded_params, batch_pad, batch_real, out_real):
    """One no-grid pallas_call for the whole (padded) network."""
    n_layers = len(padded_params)
    in_pad = padded_params[0][0].shape[0]
    out_pad = padded_params[-1][0].shape[1]

    kernel = _make_fcnn_kernel(n_layers, batch_real, out_real)

    in_specs = [pl.BlockSpec((batch_pad, in_pad), lambda: (0, 0))]
    for w, b in padded_params:
        in_specs.append(pl.BlockSpec(w.shape, lambda: (0, 0)))
        in_specs.append(pl.BlockSpec(b.shape, lambda: (0, 0)))

    out_shape = (
        jax.ShapeDtypeStruct((batch_pad, out_pad), jnp.float32),
        jax.ShapeDtypeStruct((1, 1), jnp.int32),
    )
    out_specs = (
        pl.BlockSpec((batch_pad, out_pad), lambda: (0, 0)),
        pl.BlockSpec((1, 1), lambda: (0, 0)),
    )

    return pl.pallas_call(
        kernel,
        out_shape=out_shape,
        in_specs=in_specs,
        out_specs=out_specs,
    )


class FCNNPallas:
    """Mirror of the PyTorch FCNN: Linear layers sized
    [input_dimension] + layers + [output_dimension], ReLU after EVERY layer
    (the reference applies ReLU to the output layer too)."""

    def __init__(self, input_dimension, layers, output_dimension, key):
        dims = [input_dimension] + list(layers) + [output_dimension]
        pdims = [_round_up(d, _LANE) for d in dims]

        self.input_dimension = input_dimension
        self.output_dimension = output_dimension
        self.padded_in = pdims[0]
        self.padded_out = pdims[-1]

        self.params = []          # real-size params (reference math)
        self.padded_params = []   # lane-padded params fed to the fused kernel
        for i in range(len(dims) - 1):
            fan_in, fan_out = dims[i], dims[i + 1]
            key, kw, kb = jax.random.split(key, 3)
            # nn.Linear-style U(-1/sqrt(fan_in), +1/sqrt(fan_in)) init.
            bound = 1.0 / (fan_in ** 0.5)
            w = jax.random.uniform(kw, (fan_in, fan_out), jnp.float32, -bound, bound)
            b = jax.random.uniform(kb, (fan_out,), jnp.float32, -bound, bound)
            self.params.append((w, b))

            wp = jnp.zeros((pdims[i], pdims[i + 1]), jnp.float32)
            wp = wp.at[:fan_in, :fan_out].set(w)
            bp = jnp.zeros((1, pdims[i + 1]), jnp.float32)
            bp = bp.at[0, :fan_out].set(b)
            self.padded_params.append((wp, bp))

        self._cache = {}          # jitted fused runner per real batch size

    def _runner(self, batch_real):
        if batch_real not in self._cache:
            batch_pad = _round_up(max(batch_real, 1), _SUBLANE)
            call = _build_fused_call(self.padded_params, batch_pad,
                                     batch_real, self.output_dimension)
            flat_params = [a for wb in self.padded_params for a in wb]
            in_dim, in_pad = self.input_dimension, self.padded_in
            out_dim = self.output_dimension

            def run(x):
                xp = jnp.pad(x.astype(jnp.float32),
                             ((0, batch_pad - batch_real),
                              (0, in_pad - in_dim)))
                out_padded, idx = call(xp, *flat_params)
                return out_padded[:batch_real, :out_dim], idx[0, 0]

            self._cache[batch_real] = jax.jit(run)
        return self._cache[batch_real]

    def forward(self, x):
        out, _ = self._runner(x.shape[0])(x)
        return out

    def prediction(self, x):
        # torch.argmax(out): single global argmax over the flattened logits.
        _, idx = self._runner(x.shape[0])(x)
        return idx


if __name__ == "__main__":
    key = jax.random.PRNGKey(0)
    k_in, k_model = jax.random.split(key)

    batch = 8
    input_dimension = 32
    layers = [64, 48]
    output_dimension = 10

    model = FCNNPallas(input_dimension, layers, output_dimension, k_model)
    x = jax.random.normal(k_in, (batch, input_dimension), jnp.float32)

    out = model.forward(x)
    pred = model.prediction(x)
    jax.block_until_ready(out)
    jax.block_until_ready(pred)

    assert out.shape == (batch, output_dimension)

    # Pure-JAX reference on the unpadded params.
    ref = x
    for w, b in model.params:
        ref = jnp.maximum(ref @ w + b, 0.0)
    assert jnp.allclose(out, ref, rtol=1e-5, atol=1e-5), "forward mismatch"
    assert int(pred) == int(jnp.argmax(out)), "argmax mismatch"

    print("KERNEL_OK")
</pallas_src>

<mosaic_0001>
module attributes {stable_mosaic.version = 11 : i64} {
  func.func @kernel(%arg0: memref<8x128xf32, #tpu.memory_space<vmem>>, %arg1: memref<128x128xf32, #tpu.memory_space<vmem>>, %arg2: memref<1x128xf32, #tpu.memory_space<vmem>>, %arg3: memref<128x128xf32, #tpu.memory_space<vmem>>, %arg4: memref<1x128xf32, #tpu.memory_space<vmem>>, %arg5: memref<128x128xf32, #tpu.memory_space<vmem>>, %arg6: memref<1x128xf32, #tpu.memory_space<vmem>>, %arg7: memref<8x128xf32, #tpu.memory_space<vmem>>, %arg8: memref<1x1xi32, #tpu.memory_space<vmem>>) attributes {dimension_semantics = [], scalar_prefetch = 0 : i64, scratch_operands = 0 : i64, tpu.core_type = #tpu.core_type<tc>} {
    %c0 = arith.constant 0 : index
    %c0_0 = arith.constant 0 : index
    %0 = vector.load %arg0[%c0, %c0_0] : memref<8x128xf32, #tpu.memory_space<vmem>>, vector<8x128xf32>
    %c0_1 = arith.constant 0 : index
    %c0_2 = arith.constant 0 : index
    %1 = vector.load %arg1[%c0_1, %c0_2] : memref<128x128xf32, #tpu.memory_space<vmem>>, vector<128x128xf32>
    %c0_3 = arith.constant 0 : index
    %c0_4 = arith.constant 0 : index
    %2 = vector.load %arg2[%c0_3, %c0_4] : memref<1x128xf32, #tpu.memory_space<vmem>>, vector<1x128xf32>
    %cst = arith.constant dense<0.000000e+00> : vector<8x128xf32>
    %3 = tpu.matmul %0, %1, %cst {dimension_numbers = #tpu.dot_dimension_numbers<[1], [0], [0], [1], [0, 0, 1, 1], [], []>} : vector<8x128xf32>, vector<128x128xf32>, vector<8x128xf32> -> vector<8x128xf32>
    %4 = vector.broadcast %2 : vector<1x128xf32> to vector<8x128xf32>
    %5 = arith.addf %3, %4 : vector<8x128xf32>
    %cst_5 = arith.constant 0.000000e+00 : f32
    %6 = vector.broadcast %cst_5 : f32 to vector<8x128xf32>
    %7 = arith.maximumf %5, %6 : vector<8x128xf32>
    %c0_6 = arith.constant 0 : index
    %c0_7 = arith.constant 0 : index
    %8 = vector.load %arg3[%c0_6, %c0_7] : memref<128x128xf32, #tpu.memory_space<vmem>>, vector<128x128xf32>
    %c0_8 = arith.constant 0 : index
    %c0_9 = arith.constant 0 : index
    %9 = vector.load %arg4[%c0_8, %c0_9] : memref<1x128xf32, #tpu.memory_space<vmem>>, vector<1x128xf32>
    %cst_10 = arith.constant dense<0.000000e+00> : vector<8x128xf32>
    %10 = tpu.matmul %7, %8, %cst_10 {dimension_numbers = #tpu.dot_dimension_numbers<[1], [0], [0], [1], [0, 0, 1, 1], [], []>} : vector<8x128xf32>, vector<128x128xf32>, vector<8x128xf32> -> vector<8x128xf32>
    %11 = vector.broadcast %9 : vector<1x128xf32> to vector<8x128xf32>
    %12 = arith.addf %10, %11 : vector<8x128xf32>
    %cst_11 = arith.constant 0.000000e+00 : f32
    %13 = vector.broadcast %cst_11 : f32 to vector<8x128xf32>
    %14 = arith.maximumf %12, %13 : vector<8x128xf32>
    %c0_12 = arith.constant 0 : index
    %c0_13 = arith.constant 0 : index
    %15 = vector.load %arg5[%c0_12, %c0_13] : memref<128x128xf32, #tpu.memory_space<vmem>>, vector<128x128xf32>
    %c0_14 = arith.constant 0 : index
    %c0_15 = arith.constant 0 : index
    %16 = vector.load %arg6[%c0_14, %c0_15] : memref<1x128xf32, #tpu.memory_space<vmem>>, vector<1x128xf32>
    %cst_16 = arith.constant dense<0.000000e+00> : vector<8x128xf32>
    %17 = tpu.matmul %14, %15, %cst_16 {dimension_numbers = #tpu.dot_dimension_numbers<[1], [0], [0], [1], [0, 0, 1, 1], [], []>} : vector<8x128xf32>, vector<128x128xf32>, vector<8x128xf32> -> vector<8x128xf32>
    %18 = vector.broadcast %16 : vector<1x128xf32> to vector<8x128xf32>
    %19 = arith.addf %17, %18 : vector<8x128xf32>
    %cst_17 = arith.constant 0.000000e+00 : f32
    %20 = vector.broadcast %cst_17 : f32 to vector<8x128xf32>
    %21 = arith.maximumf %19, %20 : vector<8x128xf32>
    %c0_18 = arith.constant 0 : index
    %c0_19 = arith.constant 0 : index
    %22 = vector.load %arg7[%c0_18, %c0_19] : memref<8x128xf32, #tpu.memory_space<vmem>>, vector<8x128xf32>
    tpu.vector_store %arg7[%c0_18, %c0_19], %21 {strides = array<i32>} : memref<8x128xf32, #tpu.memory_space<vmem>>, vector<8x128xf32>,
    %23 = tpu.iota {dimensions = array<i32: 0>} : vector<8x128xi32>
    %24 = tpu.iota {dimensions = array<i32: 1>} : vector<8x128xi32>
    %c8_i32 = arith.constant 8 : i32
    %25 = vector.broadcast %c8_i32 : i32 to vector<8x128xi32>
    %26 = arith.cmpi slt, %23, %25 : vector<8x128xi32>
    %c10_i32 = arith.constant 10 : i32
    %27 = vector.broadcast %c10_i32 : i32 to vector<8x128xi32>
    %28 = arith.cmpi slt, %24, %27 : vector<8x128xi32>
    %29 = arith.andi %26, %28 : vector<8x128xi1>
    %cst_20 = arith.constant -1.000000e+00 : f32
    %30 = vector.broadcast %cst_20 : f32 to vector<8x128xf32>
    %31 = arith.select %29, %21, %30 : vector<8x128xi1>, vector<8x128xf32>
    %cst_21 = arith.constant dense<0xFF800000> : vector<8xf32>
    %32 = vector.multi_reduction <maximumf>, %31, %cst_21 [1] : vector<8x128xf32> to vector<8xf32>
    %33 = vector.shape_cast %32 : vector<8xf32> to vector<8x1xf32>
    %cst_22 = arith.constant dense<0xFF800000> : vector<1xf32>
    %34 = vector.multi_reduction <maximumf>, %33, %cst_22 [0] : vector<8x1xf32> to vector<1xf32>
    %35 = vector.shape_cast %34 : vector<1xf32> to vector<1x1xf32>
    %c10_i32_23 = arith.constant 10 : i32
    %36 = vector.broadcast %c10_i32_23 : i32 to vector<8x128xi32>
    %37 = arith.muli %23, %36 : vector<8x128xi32>
    %38 = arith.addi %37, %24 : vector<8x128xi32>
    %39 = vector.broadcast %35 : vector<1x1xf32> to vector<8x128xf32>
    %40 = arith.cmpf oeq, %31, %39 : vector<8x128xf32>
    %41 = arith.andi %29, %40 : vector<8x128xi1>
    %c80_i32 = arith.constant 80 : i32
    %42 = vector.broadcast %c80_i32 : i32 to vector<8x128xi32>
    %43 = arith.select %41, %38, %42 : vector<8x128xi1>, vector<8x128xi32>
    %cst_24 = arith.constant dense<2147483647> : vector<8xi32>
    %44 = vector.multi_reduction <minsi>, %43, %cst_24 [1] : vector<8x128xi32> to vector<8xi32>
    %45 = vector.shape_cast %44 : vector<8xi32> to vector<8x1xi32>
    %cst_25 = arith.constant dense<2147483647> : vector<1xi32>
    %46 = vector.multi_reduction <minsi>, %45, %cst_25 [0] : vector<8x1xi32> to vector<1xi32>
    %47 = vector.shape_cast %46 : vector<1xi32> to vector<1x1xi32>
    %c0_26 = arith.constant 0 : index
    %c0_27 = arith.constant 0 : index
    %48 = vector.load %arg8[%c0_26, %c0_27] : memref<1x1xi32, #tpu.memory_space<vmem>>, vector<1x1xi32>
    tpu.vector_store %arg8[%c0_26, %c0_27], %47 {strides = array<i32>} : memref<1x1xi32, #tpu.memory_space<vmem>>, vector<1x1xi32>,
    return
  }
}

</mosaic_0001>

<llo_original>
// kernel: run.1
$region0: #{run.1}
  #allocation0 [shape = 'u32[]', space=smem, size = 0x4, offset = 0x4, fixed_abs, tag = 'smem constant byte address 0x4 - core index']
  #allocation1 [shape = 'u32[72,128]{1,0:T(1,128)}', space=vmem, size = 0x9000, scoped, tag = 'internal scratch']
  %s0 = inlined_call_operand.vmem [shape: f32[8,128], index: 0, kind: input, shape index: {}]
  %s1 = inlined_call_operand.hbm [shape: f32[128,128], index: 1, kind: input, shape index: {}]
  %s2 = inlined_call_operand.vmem [shape: f32[1,128], index: 2, kind: input, shape index: {}]
  %s3 = inlined_call_operand.hbm [shape: f32[128,128], index: 3, kind: input, shape index: {}]
  %s4 = inlined_call_operand.vmem [shape: f32[1,128], index: 4, kind: input, shape index: {}]
  %s5 = inlined_call_operand.hbm [shape: f32[128,128], index: 5, kind: input, shape index: {}]
  %s6 = inlined_call_operand.vmem [shape: f32[1,128], index: 6, kind: input, shape index: {}]
  %s7 = inlined_call_operand.hbm [shape: f32[8,128], index: 7, kind: output, shape index: {0}]
  %s8 = inlined_call_operand.hbm [shape: s32[1,1], index: 8, kind: output, shape index: {1}]
  %9 = xla_tuple %s7, %s8
  %s10 = sld [smem:[#allocation0]]
  $region58: #{run.1} parent=0
    _
  %s12 = ssub.s32 1, %s10
  %s13 = scalar_select 0, %s12, %s10
  $region1: #{run.1} parent=0
    #allocation2 [shape = 'u8[65536]{0}', space=vmem, size = 0x10000, scoped, tag = 'input window, operand 1, single buffered']
    #allocation3 [shape = 's32[1]{0}', space=sflag, size = 0x4, scoped, tag = 'scoped memory for run.1']
    #allocation4 [shape = 's32[1]{0}', space=sflag, size = 0x4, scoped, tag = 'scoped memory for run.1']
    #allocation5 [shape = 'u8[65536]{0}', space=vmem, size = 0x10000, scoped, tag = 'input window, operand 3, single buffered']
    #allocation6 [shape = 's32[1]{0}', space=sflag, size = 0x4, scoped, tag = 'scoped memory for run.1']
    #allocation7 [shape = 'u8[65536]{0}', space=vmem, size = 0x10000, scoped, tag = 'input window, operand 5, single buffered']
    #allocation8 [shape = 'u8[4096]{0}', space=vmem, size = 0x1000, scoped, tag = 'output window, operand 0, single buffered']
    #allocation9 [shape = 'u8[512]{0}', space=vmem, size = 0x400, scoped, tag = 'output window, operand 1, single buffered']
    #allocation10 [shape = 's32[1]{0}', space=sflag, size = 0x4, scoped, tag = 'scoped memory for run.1']
    %14 = vsyncpa [#allocation3], 0
    %15 = vsyncpa [#allocation6], 0
    %16 = vsyncpa [#allocation4], 0
    %17 = vsyncpa [#allocation10], 0
    // Predicated region
    $region2: #{run.1} parent=1 // pred_check
      _
    $region3: #{run.1} parent=1 // pred_check_branch
      %19 = sbr.rel (0) target = $region5
    $region4: #{run.1} parent=1 // pred_region
      _
    $region5: #{run.1} parent=1 // pred_fallthru
      _
    // Predicated region
    $region6: #{run.1} parent=1 // pred_check
      _
    $region7: #{run.1} parent=1 // pred_check_branch
      %21 = sbr.rel (0) target = $region9
    $region8: #{run.1} parent=1 // pred_region
      %23 = vsyncadd [#allocation3], 0
      %s24 = sshll.u32 %s1, 4
      %s25 = int_to_ptr.hbm [resolvable:$true] %s24
      %s26 = sshll.u32 [#allocation2], 4
      %s27 = int_to_ptr.vmem [resolvable:$true] %s26
      %32 = dma.hbm_to_vmem [thread:$0]  %s25, 2048, %s27, [#allocation3], 128, 128, 8
    $region9: #{run.1} parent=1 // pred_fallthru
      _
    // Predicated region
    $region10: #{run.1} parent=1 // pred_check
      _
    $region11: #{run.1} parent=1 // pred_check_branch
      %34 = sbr.rel (0) target = $region13
    $region12: #{run.1} parent=1 // pred_region
      _
    $region13: #{run.1} parent=1 // pred_fallthru
      _
    // Predicated region
    $region14: #{run.1} parent=1 // pred_check
      _
    $region15: #{run.1} parent=1 // pred_check_branch
      %36 = sbr.rel (0) target = $region17
    $region16: #{run.1} parent=1 // pred_region
      %38 = vsyncadd [#allocation6], 0
      %s39 = sshll.u32 %s3, 4
      %s40 = int_to_ptr.hbm [resolvable:$true] %s39
      %s41 = sshll.u32 [#allocation5], 4
      %s42 = int_to_ptr.vmem [resolvable:$true] %s41
      %47 = dma.hbm_to_vmem [thread:$0]  %s40, 2048, %s42, [#allocation6], 128, 128, 8
    $region17: #{run.1} parent=1 // pred_fallthru
      _
    // Predicated region
    $region18: #{run.1} parent=1 // pred_check
      _
    $region19: #{run.1} parent=1 // pred_check_branch
      %49 = sbr.rel (0) target = $region21
    $region20: #{run.1} parent=1 // pred_region
      _
    $region21: #{run.1} parent=1 // pred_fallthru
      _
    // Predicated region
    $region22: #{run.1} parent=1 // pred_check
      _
    $region23: #{run.1} parent=1 // pred_check_branch
      %51 = sbr.rel (0) target = $region25
    $region24: #{run.1} parent=1 // pred_region
      %53 = vsyncadd [#allocation6], 0
      %s54 = sshll.u32 %s5, 4
      %s55 = int_to_ptr.hbm [resolvable:$true] %s54
      %s56 = sshll.u32 [#allocation7], 4
      %s57 = int_to_ptr.vmem [resolvable:$true] %s56
      %62 = dma.hbm_to_vmem [thread:$0]  %s55, 2048, %s57, [#allocation6], 128, 128, 8
    $region25: #{run.1} parent=1 // pred_fallthru
      _
    // Predicated region
    $region26: #{run.1} parent=1 // pred_check
      _
    $region27: #{run.1} parent=1 // pred_check_branch
      %64 = sbr.rel (0) target = $region29
    $region28: #{run.1} parent=1 // pred_region
      _
    $region29: #{run.1} parent=1 // pred_fallthru
      _
    // Predicated region
    $region30: #{run.1} parent=1 // pred_check
      _
    $region31: #{run.1} parent=1 // pred_check_branch
      %66 = sbr.rel (0) target = $region33
    $region32: #{run.1} parent=1 // pred_region
      %68 = dma.done [#allocation3], 2048
    $region33: #{run.1} parent=1 // pred_fallthru
      _
    // Predicated region
    $region34: #{run.1} parent=1 // pred_check
      _
    $region35: #{run.1} parent=1 // pred_check_branch
      %70 = sbr.rel (0) target = $region37
    $region36: #{run.1} parent=1 // pred_region
      %72 = dma.done [#allocation6], 2048
    $region37: #{run.1} parent=1 // pred_fallthru
      _
    // Predicated region
    $region38: #{run.1} parent=1 // pred_check
      _
    $region39: #{run.1} parent=1 // pred_check_branch
      %74 = sbr.rel (0) target = $region41
    $region40: #{run.1} parent=1 // pred_region
      %76 = dma.done [#allocation6], 2048
    $region41: #{run.1} parent=1 // pred_fallthru
      _
    %v77 = vld [vmem:[%s0] sm:$0xff]
    %v78 = vld [vmem:[#allocation2] sm:$0xff]
    %v79 = vld [vmem:[#allocation2 + $0x8] sm:$0xff]
    %v80 = vld [vmem:[#allocation2 + $0x10] sm:$0xff]
    %v81 = vld [vmem:[#allocation2 + $0x18] sm:$0xff]
    %v82 = vld [vmem:[#allocation2 + $0x20] sm:$0xff]
    %v83 = vld [vmem:[#allocation2 + $0x28] sm:$0xff]
    %v84 = vld [vmem:[#allocation2 + $0x30] sm:$0xff]
    %v85 = vld [vmem:[#allocation2 + $0x38] sm:$0xff]
    %v86 = vld [vmem:[#allocation2 + $0x40] sm:$0xff]
    %v87 = vld [vmem:[#allocation2 + $0x48] sm:$0xff]
    %v88 = vld [vmem:[#allocation2 + $0x50] sm:$0xff]
    %v89 = vld [vmem:[#allocation2 + $0x58] sm:$0xff]
    %v90 = vld [vmem:[#allocation2 + $0x60] sm:$0xff]
    %v91 = vld [vmem:[#allocation2 + $0x68] sm:$0xff]
    %v92 = vld [vmem:[#allocation2 + $0x70] sm:$0xff]
    %v93 = vld [vmem:[#allocation2 + $0x78] sm:$0xff]
    %v94 = vld [vmem:[%s2] sm:$0x1]
    %v96 = vperm.slane %v94, 0
    %98 = vmatpush.msra.mxu0 %v93
    %99 = vmatpush.msra.mxu0 %v92
    %100 = vmatpush.msra.mxu0 %v91
    %101 = vmatpush.msra.mxu0 %v90
    %102 = vmatpush.msra.mxu0 %v89
    %103 = vmatpush.msra.mxu0 %v88
    %104 = vmatpush.msra.mxu0 %v87
    %105 = vmatpush.msra.mxu0 %v86
    %106 = vmatpush.msra.mxu0 %v85
    %107 = vmatpush.msra.mxu0 %v84
    %108 = vmatpush.msra.mxu0 %v83
    %109 = vmatpush.msra.mxu0 %v82
    %110 = vmatpush.msra.mxu0 %v81
    %111 = vmatpush.msra.mxu0 %v80
    %112 = vmatpush.msra.mxu0 %v79
    %113 = vmatpush.msra.mxu0 %v78
    %114 = vmatmul.f32.gmra.mxu0 %v77
    %v115 = vpop.f32.mrf.mxu0
    %v116 = vadd.f32 %v96, %v115
    %117 = vdwg.mxu0
    %v118 = vmax.f32 %v116, 0.0
    %v119 = vld [vmem:[#allocation5] sm:$0xff]
    %v120 = vld [vmem:[#allocation5 + $0x8] sm:$0xff]
    %v121 = vld [vmem:[#allocation5 + $0x10] sm:$0xff]
    %v122 = vld [vmem:[#allocation5 + $0x18] sm:$0xff]
    %v123 = vld [vmem:[#allocation5 + $0x20] sm:$0xff]
    %v124 = vld [vmem:[#allocation5 + $0x28] sm:$0xff]
    %v125 = vld [vmem:[#allocation5 + $0x30] sm:$0xff]
    %v126 = vld [vmem:[#allocation5 + $0x38] sm:$0xff]
    %v127 = vld [vmem:[#allocation5 + $0x40] sm:$0xff]
    %v128 = vld [vmem:[#allocation5 + $0x48] sm:$0xff]
    %v129 = vld [vmem:[#allocation5 + $0x50] sm:$0xff]
    %v130 = vld [vmem:[#allocation5 + $0x58] sm:$0xff]
    %v131 = vld [vmem:[#allocation5 + $0x60] sm:$0xff]
    %v132 = vld [vmem:[#allocation5 + $0x68] sm:$0xff]
    %v133 = vld [vmem:[#allocation5 + $0x70] sm:$0xff]
    %v134 = vld [vmem:[#allocation5 + $0x78] sm:$0xff]
    %v135 = vld [vmem:[%s4] sm:$0x1]
    %v137 = vperm.slane %v135, 0
    %139 = vmatpush.msra.mxu0 %v134
    %140 = vmatpush.msra.mxu0 %v133
    %141 = vmatpush.msra.mxu0 %v132
    %142 = vmatpush.msra.mxu0 %v131
    %143 = vmatpush.msra.mxu0 %v130
    %144 = vmatpush.msra.mxu0 %v129
    %145 = vmatpush.msra.mxu0 %v128
    %146 = vmatpush.msra.mxu0 %v127
    %147 = vmatpush.msra.mxu0 %v126
    %148 = vmatpush.msra.mxu0 %v125
    %149 = vmatpush.msra.mxu0 %v124
    %150 = vmatpush.msra.mxu0 %v123
    %151 = vmatpush.msra.mxu0 %v122
    %152 = vmatpush.msra.mxu0 %v121
    %153 = vmatpush.msra.mxu0 %v120
    %154 = vmatpush.msra.mxu0 %v119
    %155 = vmatmul.f32.gmra.mxu0 %v118
    %v156 = vpop.f32.mrf.mxu0
    %v157 = vadd.f32 %v137, %v156
    %158 = vdwg.mxu0
    %v159 = vmax.f32 %v157, 0.0
    %v160 = vld [vmem:[#allocation7] sm:$0xff]
    %v161 = vld [vmem:[#allocation7 + $0x8] sm:$0xff]
    %v162 = vld [vmem:[#allocation7 + $0x10] sm:$0xff]
    %v163 = vld [vmem:[#allocation7 + $0x18] sm:$0xff]
    %v164 = vld [vmem:[#allocation7 + $0x20] sm:$0xff]
    %v165 = vld [vmem:[#allocation7 + $0x28] sm:$0xff]
    %v166 = vld [vmem:[#allocation7 + $0x30] sm:$0xff]
    %v167 = vld [vmem:[#allocation7 + $0x38] sm:$0xff]
    %v168 = vld [vmem:[#allocation7 + $0x40] sm:$0xff]
    %v169 = vld [vmem:[#allocation7 + $0x48] sm:$0xff]
    %v170 = vld [vmem:[#allocation7 + $0x50] sm:$0xff]
    %v171 = vld [vmem:[#allocation7 + $0x58] sm:$0xff]
    %v172 = vld [vmem:[#allocation7 + $0x60] sm:$0xff]
    %v173 = vld [vmem:[#allocation7 + $0x68] sm:$0xff]
    %v174 = vld [vmem:[#allocation7 + $0x70] sm:$0xff]
    %v175 = vld [vmem:[#allocation7 + $0x78] sm:$0xff]
    %v176 = vld [vmem:[%s6] sm:$0x1]
    %v178 = vperm.slane %v176, 0
    %180 = vmatpush.msra.mxu0 %v175
    %181 = vmatpush.msra.mxu0 %v174
    %182 = vmatpush.msra.mxu0 %v173
    %183 = vmatpush.msra.mxu0 %v172
    %184 = vmatpush.msra.mxu0 %v171
    %185 = vmatpush.msra.mxu0 %v170
    %186 = vmatpush.msra.mxu0 %v169
    %187 = vmatpush.msra.mxu0 %v168
    %188 = vmatpush.msra.mxu0 %v167
    %189 = vmatpush.msra.mxu0 %v166
    %190 = vmatpush.msra.mxu0 %v165
    %191 = vmatpush.msra.mxu0 %v164
    %192 = vmatpush.msra.mxu0 %v163
    %193 = vmatpush.msra.mxu0 %v162
    %194 = vmatpush.msra.mxu0 %v161
    %195 = vmatpush.msra.mxu0 %v160
    %196 = vmatmul.f32.gmra.mxu0 %v159
    %v197 = vpop.f32.mrf.mxu0
    %v198 = vadd.f32 %v178, %v197
    %199 = vdwg.mxu0
    %v200 = vmax.f32 %v198, 0.0
    %201 = vst [vmem:[#allocation8] sm:$0xff] %v200
    %v202 = vlaneseq
    %v203 = vshrl.u32 %v202, 7
    %v204 = vlaneseq
    %v205 = vand.u32 %v204, 127
    %vm206 = vcmp.lt.s32.totalorder %v203, 8
    %vm207 = vcmp.lt.s32.totalorder %v205, 10
    %vm208 = vmand %vm206, %vm207
    %v209 = vsel %vm208, %v200, -1.0
    %210 = vmax.xlane.f32.xlu0 %v209
    %v211 = vpop.xlane.xlu0 %210
    %v212 = vrot.slane %v211, 4
    %v213 = vmax.f32 %v211, %v212
    %v214 = vrot.slane %v213, 2
    %v215 = vmax.f32 %v213, %v214
    %v216 = vrot.slane %v215, 1
    %v217 = vmax.f32 %v215, %v216
    %v218 = vmul.u32 %v203, 10
    %v219 = vadd.s32 %v218, %v205
    %vm220 = vcmp.eq.f32.partialorder %v209, %v217
    %vm221 = vmand %vm208, %vm220
    %v222 = vsel %vm221, %v219, 80
    %v223 = vand.u32 %v222, 65535
    %v224 = vshra.s32 %v222, 16
    %v225 = vcvt.s32.f32 %v223
    %v226 = vcvt.s32.f32 %v224
    %227 = vmin.xlane.f32.xlu0 %v226
    %v228 = vpop.xlane.xlu0 %227
    %vm229 = vcmp.eq.f32.partialorder %v226, %v228
    %v230 = vsel %vm229, %v225, inf
    %231 = vmin.xlane.f32.xlu0 %v230
    %v232 = vpop.xlane.xlu0 %231
    %v233 = vcvt.f32.s32 %v232
    %v234 = vcvt.f32.s32 %v228
    %v235 = vshll.u32 %v234, 16
    %v236 = vadd.s32 %v235, %v233
    %v237 = vrot.slane %v236, 4
    %vm238 = vcmp.lt.s32.totalorder %v236, %v237
    %v239 = vsel %vm238, %v236, %v237
    %v240 = vrot.slane %v239, 2
    %vm241 = vcmp.lt.s32.totalorder %v239, %v240
    %v242 = vsel %vm241, %v239, %v240
    %v243 = vrot.slane %v242, 1
    %vm244 = vcmp.lt.s32.totalorder %v242, %v243
    %v245 = vsel %vm244, %v242, %v243
    %vm246 = vcmask 0
    %247 = vst.msk [vmem:[#allocation9] sm:$0x1] %vm246, %v245
    // Predicated region
    $region42: #{run.1} parent=1 // pred_check
      _
    $region43: #{run.1} parent=1 // pred_check_branch
      %249 = sbr.rel (0) target = $region45
    $region44: #{run.1} parent=1 // pred_region
      %251 = vsyncadd [#allocation4], 0
      %s253 = sshll.u32 [#allocation8], 4
      %s254 = int_to_ptr.vmem [resolvable:$true] %s253
      %s255 = sshll.u32 %s7, 4
      %s256 = int_to_ptr.hbm [resolvable:$true] %s255
      %258 = dma.vmem_to_hbm [thread:$0]  %s254, 128, %s256, [#allocation4]
    $region45: #{run.1} parent=1 // pred_fallthru
      _
    // Predicated region
    $region46: #{run.1} parent=1 // pred_check
      _
    $region47: #{run.1} parent=1 // pred_check_branch
      %260 = sbr.rel (0) target = $region49
    $region48: #{run.1} parent=1 // pred_region
      %262 = vsyncadd [#allocation10], 0
      %s264 = sshll.u32 [#allocation9], 4
      %s265 = int_to_ptr.vmem [resolvable:$true] %s264
      %s266 = sshll.u32 %s8, 4
      %s267 = int_to_ptr.hbm [resolvable:$true] %s266
      %269 = dma.vmem_to_hbm [thread:$0]  %s265, 16, %s267, [#allocation10]
    $region49: #{run.1} parent=1 // pred_fallthru
      _
    // Predicated region
    $region50: #{run.1} parent=1 // pred_check
      _
    $region51: #{run.1} parent=1 // pred_check_branch
      %271 = sbr.rel (0) target = $region53
    $region52: #{run.1} parent=1 // pred_region
      %273 = dma.done [#allocation4], 128
    $region53: #{run.1} parent=1 // pred_fallthru
      _
    // Predicated region
    $region54: #{run.1} parent=1 // pred_check
      _
    $region55: #{run.1} parent=1 // pred_check_branch
      %275 = sbr.rel (0) target = $region57
    $region56: #{run.1} parent=1 // pred_region
      %277 = dma.done [#allocation10], 16
    $region57: #{run.1} parent=1 // pred_fallthru
      _
    %278 = vsyncpa [#allocation3], 1
    %279 = vsyncpa [#allocation6], 1
    %280 = vsyncpa [#allocation4], 1
    %281 = vsyncpa [#allocation10], 1

</llo_original>
